<compile_context>
chip_gen: v7x
topology: tpu7x:2x2x1
jax: 0.10.0
libtpu: 0.0.40
codegen_flags: <defaults>
</compile_context>

<pallas_src>
import functools
import math

import jax
import jax.numpy as jnp
from jax.experimental import pallas as pl
from jax.experimental.pallas import tpu as pltpu


# ----------------------------------------------------------------------------
# helpers
# ----------------------------------------------------------------------------
def _round_up(x, m):
    return ((x + m - 1) // m) * m


def _act(x, activation):
    if activation == "tanh":
        return jnp.tanh(x)
    if activation == "leakyrelu":
        return jnp.where(x >= 0, x, 0.01 * x)   # nn.LeakyReLU() default slope
    return x  # PyTorch "no such activate function" path -> identity


# ----------------------------------------------------------------------------
# Kernels.  Grid = (row tiles,), "parallel".  All layers run inside the kernel
# over a VMEM-resident weight stack.  Carry row layout (built by the wrapper):
#   rows [0, Tp)      : triples  [ s | p | o ]
#   rows [Tp, Tp+Op)  : objects  [ 0 | 0 | obj ]
# ----------------------------------------------------------------------------
def _gconv_packed_kernel(carry_ref, w_ref, b_ref, out_ref, *, num_layers, activation):
    """Small-D path: one (tile, P) @ (P, P) matmul per layer, P = roundup(3D,128)."""
    x = carry_ref[...]                                             # bf16 (tile, P)
    for l in range(num_layers):                                    # unrolled (L static)
        y = jnp.dot(x, w_ref[l], preferred_element_type=jnp.float32) + b_ref[l]
        y = _act(y, activation)                                    # f32
        if l + 1 < num_layers:
            x = y.astype(jnp.bfloat16)                             # bf16 carry
        else:
            out_ref[...] = y.astype(out_ref.dtype)                 # full-width f32 out


def _gconv_wide_kernel(carry_ref, wr_ref, wo_ref, br_ref, bo_ref, out_ref, spo_sc,
                       *, num_layers, dp, n_pred_blocks, activation):
    """General path (Dp = roundup(D,128)): per layer one K=3*Dp matmul (net_r) and
    two K=Dp column-slice matmuls (net_o); s/p/o are column slices of one bf16
    scratch -- no per-layer concatenate."""
    for l in range(num_layers):                                    # unrolled (L static)
        x = carry_ref[...] if l == 0 else spo_sc[...]              # bf16 (tile, 3*dp)
        p_new = _act(jnp.dot(x, wr_ref[l], preferred_element_type=jnp.float32)
                     + br_ref[l], activation)                      # f32 (tile, dp)
        o_new = _act(jnp.dot(x[:, 2 * dp:], wo_ref[l],
                             preferred_element_type=jnp.float32)
                     + bo_ref[l], activation)
        if l + 1 < num_layers:
            s_new = _act(jnp.dot(x[:, :dp], wo_ref[l],
                                 preferred_element_type=jnp.float32)
                         + bo_ref[l], activation)
            spo_sc[:, :dp] = s_new.astype(jnp.bfloat16)
            spo_sc[:, dp:2 * dp] = p_new.astype(jnp.bfloat16)
            spo_sc[:, 2 * dp:] = o_new.astype(jnp.bfloat16)
        else:
            # pred tiles emit the new predicate, obj tiles emit the new object rows
            is_obj = pl.program_id(0) >= n_pred_blocks

            @pl.when(is_obj)
            def _():
                out_ref[...] = o_new.astype(out_ref.dtype)

            @pl.when(jnp.logical_not(is_obj))
            def _():
                out_ref[...] = p_new.astype(out_ref.dtype)


# ----------------------------------------------------------------------------
# Parameter preparation (hoisted: run ONCE per parameter set, not per forward)
# ----------------------------------------------------------------------------
def prepare_gconv_params(layer_params, input_dim):
    D = int(input_dim)
    Dp = _round_up(D, 128)
    P = _round_up(3 * D, 128)
    packed = P < 3 * Dp
    L = len(layer_params)
    f32 = jnp.float32

    if packed:
        # Combined per-layer weight: [[Wo, Wr_s, 0], [0, Wr_p, 0], [0, Wr_o, Wo]],
        # bias [bo | br | bo]; one (P,P) matmul does net_r + both net_o carries.
        w = jnp.zeros((L, P, P), f32)
        b = jnp.zeros((L, 1, P), f32)
        for l, prm in enumerate(layer_params):
            wr = prm["wr"].astype(f32)     # (3D, D), stored (in, out)
            wo = prm["wo"].astype(f32)     # (D, D)
            w = w.at[l, 0:D, 0:D].set(wo)                       # s -> s_new (net_o)
            w = w.at[l, 0:3 * D, D:2 * D].set(wr)               # [s|p|o] -> p_new
            w = w.at[l, 2 * D:3 * D, 2 * D:3 * D].set(wo)       # o -> o_new (net_o)
            b = b.at[l, 0, 0:D].set(prm["bo"].astype(f32))
            b = b.at[l, 0, D:2 * D].set(prm["br"].astype(f32))
            b = b.at[l, 0, 2 * D:3 * D].set(prm["bo"].astype(f32))
        return {"w": w.astype(jnp.bfloat16), "b": b}

    wr_s = jnp.zeros((L, 3 * Dp, Dp), f32)
    wo_s = jnp.zeros((L, Dp, Dp), f32)
    br_s = jnp.zeros((L, 1, Dp), f32)
    bo_s = jnp.zeros((L, 1, Dp), f32)
    for l, prm in enumerate(layer_params):
        for k in range(3):   # concat blocks land at k*Dp row offsets of Wr
            wr_s = wr_s.at[l, k * Dp:k * Dp + D, :D].set(
                prm["wr"][k * D:(k + 1) * D].astype(f32))
        wo_s = wo_s.at[l, :D, :D].set(prm["wo"].astype(f32))
        br_s = br_s.at[l, 0, :D].set(prm["br"].astype(f32))
        bo_s = bo_s.at[l, 0, :D].set(prm["bo"].astype(f32))
    return {"wr": wr_s.astype(jnp.bfloat16), "wo": wo_s.astype(jnp.bfloat16),
            "br": br_s, "bo": bo_s}


# ----------------------------------------------------------------------------
# GraphTripleConvNet forward (wrapper): ONE fused pallas_call
# ----------------------------------------------------------------------------
def graph_triple_conv_net(obj_vecs, pred_vecs, edges, prepared, activation=None,
                          *, max_tile_rows=512, vmem_limit_bytes=32 * 1024 * 1024):
    O, D = obj_vecs.shape
    T = pred_vecs.shape[0]
    Dp = _round_up(D, 128)
    P = _round_up(3 * D, 128)
    packed = P < 3 * Dp
    L = int((prepared["w"] if packed else prepared["wr"]).shape[0])

    bf16, f32 = jnp.bfloat16, jnp.float32

    # Row tiling: one "parallel" grid axis over (pred tiles ++ obj tiles); merging
    # guarantees >= 2 parallel blocks (v7x megacore) and one resident weight stack.
    # Tile is a multiple of 16 (native bf16 sublane tile).
    tile = min(max_tile_rows, _round_up(max(T, O, 1), 16))
    Tp = _round_up(max(T, 1), tile)
    Op = _round_up(max(O, 1), tile)
    n_t, n_o = Tp // tile, Op // tile
    Rp = Tp + Op

    slot = D if packed else Dp        # column width of each s/p/o slot in the carry
    Wc = P if packed else 3 * Dp      # total carry width (multiple of 128)

    # Layer-0 activations in bf16 (their only use is as MXU operands).
    obj_bf = jnp.zeros((Op, slot), bf16).at[:O, :D].set(obj_vecs.astype(bf16))
    pred_bf = jnp.zeros((Tp, slot), bf16).at[:T, :D].set(pred_vecs.astype(bf16))

    # Gather subject/object rows once from layer-0 objects (gather commutes with the
    # row-wise net_o, so the rows are carried through all layers inside the kernel).
    # NOTE: indices are clamped, not range-checked (torch.index_select would raise).
    # TODO(synk): for very large T, fuse this gather into the kernel via scalar
    # prefetch + in-VMEM take from the small obj table (avoids the HBM round trip).
    s_idx = jnp.zeros((Tp,), jnp.int32).at[:T].set(edges[:, 0].astype(jnp.int32))
    o_idx = jnp.zeros((Tp,), jnp.int32).at[:T].set(edges[:, 1].astype(jnp.int32))
    s0 = jnp.take(obj_bf, s_idx, axis=0, mode="clip")
    o0 = jnp.take(obj_bf, o_idx, axis=0, mode="clip")

    pred_rows = jnp.concatenate([s0, pred_bf, o0], axis=1)                      # (Tp, 3*slot)
    obj_rows = jnp.concatenate([jnp.zeros((Op, 2 * slot), bf16), obj_bf], axis=1)
    carry0 = jnp.concatenate([pred_rows, obj_rows], axis=0)                     # (Rp, 3*slot)
    if 3 * slot < Wc:
        carry0 = jnp.pad(carry0, ((0, 0), (0, Wc - 3 * slot)))                  # (Rp, Wc)

    cparams = pltpu.CompilerParams(
        dimension_semantics=("parallel",),        # row tiles shard across v7x cores
        vmem_limit_bytes=vmem_limit_bytes)        # raise for large D on v5e/v6e (128 MiB)

    if packed:
        out_w = P
        cost = pl.CostEstimate(
            flops=int(2 * Rp * P * P * L),
            transcendentals=int(Rp * P * L) if activation == "tanh" else 0,
            bytes_accessed=int(Rp * Wc * 2 + Rp * out_w * 4 + L * (P * P * 2 + P * 4)))
        out = pl.pallas_call(
            functools.partial(_gconv_packed_kernel, num_layers=L, activation=activation),
            out_shape=jax.ShapeDtypeStruct((Rp, out_w), f32),
            grid=(n_t + n_o,),
            in_specs=[
                pl.BlockSpec((tile, Wc), lambda i: (i, 0)),       # carry tile
                pl.BlockSpec((L, P, P), lambda i: (0, 0, 0)),     # resident W stack
                pl.BlockSpec((L, 1, P), lambda i: (0, 0, 0)),     # resident bias stack
            ],
            out_specs=pl.BlockSpec((tile, out_w), lambda i: (i, 0)),
            compiler_params=cparams,
            cost_estimate=cost,
        )(carry0, prepared["w"], prepared["b"])
        new_pred = out[:T, D:2 * D]
        new_obj = out[Tp:Tp + O, 2 * D:3 * D]
    else:
        out_w = Dp
        cost = pl.CostEstimate(
            flops=int(2 * Rp * 3 * Dp * Dp * L + 2 * Rp * Dp * Dp * (2 * L - 1)),
            transcendentals=int(3 * Rp * Dp * L) if activation == "tanh" else 0,
            bytes_accessed=int(Rp * Wc * 2 + Rp * out_w * 4
                               + L * ((3 * Dp * Dp + Dp * Dp) * 2 + 2 * Dp * 4)))
        out = pl.pallas_call(
            functools.partial(_gconv_wide_kernel, num_layers=L, dp=Dp,
                              n_pred_blocks=n_t, activation=activation),
            out_shape=jax.ShapeDtypeStruct((Rp, out_w), f32),
            grid=(n_t + n_o,),
            in_specs=[
                pl.BlockSpec((tile, Wc), lambda i: (i, 0)),             # carry tile
                pl.BlockSpec((L, 3 * Dp, Dp), lambda i: (0, 0, 0)),     # Wr stack
                pl.BlockSpec((L, Dp, Dp), lambda i: (0, 0, 0)),         # Wo stack
                pl.BlockSpec((L, 1, Dp), lambda i: (0, 0, 0)),          # br stack
                pl.BlockSpec((L, 1, Dp), lambda i: (0, 0, 0)),          # bo stack
            ],
            out_specs=pl.BlockSpec((tile, out_w), lambda i: (i, 0)),
            scratch_shapes=[pltpu.VMEM((tile, 3 * Dp), bf16)],
            compiler_params=cparams,
            cost_estimate=cost,
        )(carry0, prepared["wr"], prepared["wo"], prepared["br"], prepared["bo"])
        new_pred = out[:T, :D]
        new_obj = out[Tp:Tp + O, :D]

    return new_obj.astype(obj_vecs.dtype), new_pred.astype(pred_vecs.dtype)


# ----------------------------------------------------------------------------
# Parameter init (PyTorch-Linear-style: U(-1/sqrt(fan_in), 1/sqrt(fan_in)))
# Weights stored as (in, out) so y = x @ W + b == x @ W_pt.T + b.
# ----------------------------------------------------------------------------
def init_params(key, input_dim, num_layers):
    layers = []
    for layer in range(num_layers):
        k = jax.random.fold_in(key, layer)
        k1, k2, k3, k4 = jax.random.split(k, 4)
        bound_r = 1.0 / math.sqrt(3 * input_dim)
        bound_o = 1.0 / math.sqrt(input_dim)
        wr = jax.random.uniform(k1, (3 * input_dim, input_dim), jnp.float32,
                                -bound_r, bound_r)
        br = jax.random.uniform(k2, (input_dim,), jnp.float32, -bound_r, bound_r)
        wo = jax.random.uniform(k3, (input_dim, input_dim), jnp.float32,
                                -bound_o, bound_o)
        bo = jax.random.uniform(k4, (input_dim,), jnp.float32, -bound_o, bound_o)
        layers.append({"wr": wr, "br": br, "wo": wo, "bo": bo})
    return layers


# ----------------------------------------------------------------------------
# Pure-JAX reference (mirrors the PyTorch forward; matmul_dtype=bfloat16 mirrors
# the kernel's MXU operand dtype for a tight numerical check)
# ----------------------------------------------------------------------------
def _ref_forward(obj_vecs, pred_vecs, edges, layer_params, activation=None,
                 matmul_dtype=jnp.float32):
    s_idx = edges[:, 0]
    o_idx = edges[:, 1]

    def mm(x, w):
        return jnp.dot(x.astype(matmul_dtype), w.astype(matmul_dtype),
                       preferred_element_type=jnp.float32)

    for p in layer_params:
        s = obj_vecs[s_idx]
        o = obj_vecs[o_idx]
        t = jnp.concatenate([s, pred_vecs, o], axis=1)
        new_p = _act(mm(t, p["wr"]) + p["br"], activation)
        new_o = _act(mm(obj_vecs, p["wo"]) + p["bo"], activation)
        obj_vecs, pred_vecs = new_o, new_p
    return obj_vecs, pred_vecs


if __name__ == "__main__":
    def run_case(O, T, D, num_layers, activation):
        key = jax.random.PRNGKey(0)
        k_obj, k_pred, k_edge, k_param = jax.random.split(key, 4)
        obj_vecs = jax.random.normal(k_obj, (O, D), jnp.float32)
        pred_vecs = jax.random.normal(k_pred, (T, D), jnp.float32)
        edges = jax.random.randint(k_edge, (T, 2), 0, O, jnp.int32)
        layer_params = init_params(k_param, D, num_layers)

        # Hoisted: weight padding/stacking runs once per parameter set.
        prepared = prepare_gconv_params(layer_params, D)
        fwd = jax.jit(functools.partial(graph_triple_conv_net, activation=activation))
        new_obj, new_pred = fwd(obj_vecs, pred_vecs, edges, prepared)
        jax.block_until_ready((new_obj, new_pred))

        ref_obj_bf, ref_pred_bf = _ref_forward(
            obj_vecs, pred_vecs, edges, layer_params, activation=activation,
            matmul_dtype=jnp.bfloat16)
        ref_obj_f32, ref_pred_f32 = _ref_forward(
            obj_vecs, pred_vecs, edges, layer_params, activation=activation,
            matmul_dtype=jnp.float32)

        assert new_obj.shape == (O, D) and new_pred.shape == (T, D)
        # Tight check vs a reference using the same bf16 MXU operand dtype.
        assert jnp.allclose(new_obj, ref_obj_bf, atol=2e-3, rtol=2e-3)
        assert jnp.allclose(new_pred, ref_pred_bf, atol=2e-3, rtol=2e-3)
        # Loose check vs exact f32 PyTorch semantics (bf16 rounding only).
        assert jnp.allclose(new_obj, ref_obj_f32, atol=5e-2, rtol=5e-2)
        assert jnp.allclose(new_pred, ref_pred_f32, atol=5e-2, rtol=5e-2)

    # Case 1 (shipped shapes): small D -> packed path, one 128x128 matmul per layer.
    run_case(O=8, T=16, D=32, num_layers=5, activation="leakyrelu")
    # Case 2: D multiple of 128 -> wide path (K=3*Dp net_r + column-sliced net_o).
    run_case(O=12, T=24, D=128, num_layers=3, activation="tanh")

    print("KERNEL_OK")
</pallas_src>

<mosaic_0001>
module attributes {stable_mosaic.version = 11 : i64} {
  func.func @_gconv_packed_kernel(%arg0: i32, %arg1: memref<16x128xbf16, #tpu.memory_space<vmem>>, %arg2: memref<5x128x128xbf16, #tpu.memory_space<vmem>>, %arg3: memref<5x1x128xf32, #tpu.memory_space<vmem>>, %arg4: memref<16x128xf32, #tpu.memory_space<vmem>>) attributes {dimension_semantics = [#tpu.dimension_semantics<parallel>], iteration_bounds = array<i64: 2>, scalar_prefetch = 0 : i64, scratch_operands = 0 : i64, tpu.core_type = #tpu.core_type<tc>, window_params = [{transform_indices = @transform_0, window_bounds = array<i64: 16, 128>}, {pipeline_mode = #tpu.pipeline_mode<synchronous>, transform_indices = @transform_1, window_bounds = array<i64: 5, 128, 128>}, {pipeline_mode = #tpu.pipeline_mode<synchronous>, transform_indices = @transform_2, window_bounds = array<i64: 5, 1, 128>}, {transform_indices = @transform_3, window_bounds = array<i64: 16, 128>}]} {
    %c0 = arith.constant 0 : index
    %c0_0 = arith.constant 0 : index
    %0 = vector.load %arg1[%c0, %c0_0] : memref<16x128xbf16, #tpu.memory_space<vmem>>, vector<16x128xbf16>
    %c0_1 = arith.constant 0 : index
    %c0_2 = arith.constant 0 : index
    %c0_3 = arith.constant 0 : index
    %1 = vector.load %arg2[%c0_1, %c0_2, %c0_3] : memref<5x128x128xbf16, #tpu.memory_space<vmem>>, vector<1x128x128xbf16>
    %2 = vector.shape_cast %1 : vector<1x128x128xbf16> to vector<128x128xbf16>
    %cst = arith.constant dense<0.000000e+00> : vector<16x128xf32>
    %3 = tpu.matmul %0, %2, %cst {dimension_numbers = #tpu.dot_dimension_numbers<[1], [0], [0], [1], [0, 0, 1, 1], [], []>} : vector<16x128xbf16>, vector<128x128xbf16>, vector<16x128xf32> -> vector<16x128xf32>
    %c0_4 = arith.constant 0 : index
    %c0_5 = arith.constant 0 : index
    %c0_6 = arith.constant 0 : index
    %4 = vector.load %arg3[%c0_4, %c0_5, %c0_6] : memref<5x1x128xf32, #tpu.memory_space<vmem>>, vector<1x1x128xf32>
    %5 = vector.shape_cast %4 : vector<1x1x128xf32> to vector<1x128xf32>
    %6 = vector.broadcast %5 : vector<1x128xf32> to vector<16x128xf32>
    %7 = arith.addf %3, %6 : vector<16x128xf32>
    %cst_7 = arith.constant 0.000000e+00 : f32
    %8 = vector.broadcast %cst_7 : f32 to vector<16x128xf32>
    %9 = arith.cmpf oge, %7, %8 : vector<16x128xf32>
    %cst_8 = arith.constant 0.00999999977 : f32
    %10 = vector.broadcast %cst_8 : f32 to vector<16x128xf32>
    %11 = arith.mulf %10, %7 : vector<16x128xf32>
    %12 = arith.select %9, %7, %11 : vector<16x128xi1>, vector<16x128xf32>
    %13 = arith.truncf %12 : vector<16x128xf32> to vector<16x128xbf16>
    %c1 = arith.constant 1 : index
    %c0_9 = arith.constant 0 : index
    %c0_10 = arith.constant 0 : index
    %14 = vector.load %arg2[%c1, %c0_9, %c0_10] : memref<5x128x128xbf16, #tpu.memory_space<vmem>>, vector<1x128x128xbf16>
    %15 = vector.shape_cast %14 : vector<1x128x128xbf16> to vector<128x128xbf16>
    %cst_11 = arith.constant dense<0.000000e+00> : vector<16x128xf32>
    %16 = tpu.matmul %13, %15, %cst_11 {dimension_numbers = #tpu.dot_dimension_numbers<[1], [0], [0], [1], [0, 0, 1, 1], [], []>} : vector<16x128xbf16>, vector<128x128xbf16>, vector<16x128xf32> -> vector<16x128xf32>
    %c1_12 = arith.constant 1 : index
    %c0_13 = arith.constant 0 : index
    %c0_14 = arith.constant 0 : index
    %17 = vector.load %arg3[%c1_12, %c0_13, %c0_14] : memref<5x1x128xf32, #tpu.memory_space<vmem>>, vector<1x1x128xf32>
    %18 = vector.shape_cast %17 : vector<1x1x128xf32> to vector<1x128xf32>
    %19 = vector.broadcast %18 : vector<1x128xf32> to vector<16x128xf32>
    %20 = arith.addf %16, %19 : vector<16x128xf32>
    %cst_15 = arith.constant 0.000000e+00 : f32
    %21 = vector.broadcast %cst_15 : f32 to vector<16x128xf32>
    %22 = arith.cmpf oge, %20, %21 : vector<16x128xf32>
    %cst_16 = arith.constant 0.00999999977 : f32
    %23 = vector.broadcast %cst_16 : f32 to vector<16x128xf32>
    %24 = arith.mulf %23, %20 : vector<16x128xf32>
    %25 = arith.select %22, %20, %24 : vector<16x128xi1>, vector<16x128xf32>
    %26 = arith.truncf %25 : vector<16x128xf32> to vector<16x128xbf16>
    %c2 = arith.constant 2 : index
    %c0_17 = arith.constant 0 : index
    %c0_18 = arith.constant 0 : index
    %27 = vector.load %arg2[%c2, %c0_17, %c0_18] : memref<5x128x128xbf16, #tpu.memory_space<vmem>>, vector<1x128x128xbf16>
    %28 = vector.shape_cast %27 : vector<1x128x128xbf16> to vector<128x128xbf16>
    %cst_19 = arith.constant dense<0.000000e+00> : vector<16x128xf32>
    %29 = tpu.matmul %26, %28, %cst_19 {dimension_numbers = #tpu.dot_dimension_numbers<[1], [0], [0], [1], [0, 0, 1, 1], [], []>} : vector<16x128xbf16>, vector<128x128xbf16>, vector<16x128xf32> -> vector<16x128xf32>
    %c2_20 = arith.constant 2 : index
    %c0_21 = arith.constant 0 : index
    %c0_22 = arith.constant 0 : index
    %30 = vector.load %arg3[%c2_20, %c0_21, %c0_22] : memref<5x1x128xf32, #tpu.memory_space<vmem>>, vector<1x1x128xf32>
    %31 = vector.shape_cast %30 : vector<1x1x128xf32> to vector<1x128xf32>
    %32 = vector.broadcast %31 : vector<1x128xf32> to vector<16x128xf32>
    %33 = arith.addf %29, %32 : vector<16x128xf32>
    %cst_23 = arith.constant 0.000000e+00 : f32
    %34 = vector.broadcast %cst_23 : f32 to vector<16x128xf32>
    %35 = arith.cmpf oge, %33, %34 : vector<16x128xf32>
    %cst_24 = arith.constant 0.00999999977 : f32
    %36 = vector.broadcast %cst_24 : f32 to vector<16x128xf32>
    %37 = arith.mulf %36, %33 : vector<16x128xf32>
    %38 = arith.select %35, %33, %37 : vector<16x128xi1>, vector<16x128xf32>
    %39 = arith.truncf %38 : vector<16x128xf32> to vector<16x128xbf16>
    %c3 = arith.constant 3 : index
    %c0_25 = arith.constant 0 : index
    %c0_26 = arith.constant 0 : index
    %40 = vector.load %arg2[%c3, %c0_25, %c0_26] : memref<5x128x128xbf16, #tpu.memory_space<vmem>>, vector<1x128x128xbf16>
    %41 = vector.shape_cast %40 : vector<1x128x128xbf16> to vector<128x128xbf16>
    %cst_27 = arith.constant dense<0.000000e+00> : vector<16x128xf32>
    %42 = tpu.matmul %39, %41, %cst_27 {dimension_numbers = #tpu.dot_dimension_numbers<[1], [0], [0], [1], [0, 0, 1, 1], [], []>} : vector<16x128xbf16>, vector<128x128xbf16>, vector<16x128xf32> -> vector<16x128xf32>
    %c3_28 = arith.constant 3 : index
    %c0_29 = arith.constant 0 : index
    %c0_30 = arith.constant 0 : index
    %43 = vector.load %arg3[%c3_28, %c0_29, %c0_30] : memref<5x1x128xf32, #tpu.memory_space<vmem>>, vector<1x1x128xf32>
    %44 = vector.shape_cast %43 : vector<1x1x128xf32> to vector<1x128xf32>
    %45 = vector.broadcast %44 : vector<1x128xf32> to vector<16x128xf32>
    %46 = arith.addf %42, %45 : vector<16x128xf32>
    %cst_31 = arith.constant 0.000000e+00 : f32
    %47 = vector.broadcast %cst_31 : f32 to vector<16x128xf32>
    %48 = arith.cmpf oge, %46, %47 : vector<16x128xf32>
    %cst_32 = arith.constant 0.00999999977 : f32
    %49 = vector.broadcast %cst_32 : f32 to vector<16x128xf32>
    %50 = arith.mulf %49, %46 : vector<16x128xf32>
    %51 = arith.select %48, %46, %50 : vector<16x128xi1>, vector<16x128xf32>
    %52 = arith.truncf %51 : vector<16x128xf32> to vector<16x128xbf16>
    %c4 = arith.constant 4 : index
    %c0_33 = arith.constant 0 : index
    %c0_34 = arith.constant 0 : index
    %53 = vector.load %arg2[%c4, %c0_33, %c0_34] : memref<5x128x128xbf16, #tpu.memory_space<vmem>>, vector<1x128x128xbf16>
    %54 = vector.shape_cast %53 : vector<1x128x128xbf16> to vector<128x128xbf16>
    %cst_35 = arith.constant dense<0.000000e+00> : vector<16x128xf32>
    %55 = tpu.matmul %52, %54, %cst_35 {dimension_numbers = #tpu.dot_dimension_numbers<[1], [0], [0], [1], [0, 0, 1, 1], [], []>} : vector<16x128xbf16>, vector<128x128xbf16>, vector<16x128xf32> -> vector<16x128xf32>
    %c4_36 = arith.constant 4 : index
    %c0_37 = arith.constant 0 : index
    %c0_38 = arith.constant 0 : index
    %56 = vector.load %arg3[%c4_36, %c0_37, %c0_38] : memref<5x1x128xf32, #tpu.memory_space<vmem>>, vector<1x1x128xf32>
    %57 = vector.shape_cast %56 : vector<1x1x128xf32> to vector<1x128xf32>
    %58 = vector.broadcast %57 : vector<1x128xf32> to vector<16x128xf32>
    %59 = arith.addf %55, %58 : vector<16x128xf32>
    %cst_39 = arith.constant 0.000000e+00 : f32
    %60 = vector.broadcast %cst_39 : f32 to vector<16x128xf32>
    %61 = arith.cmpf oge, %59, %60 : vector<16x128xf32>
    %cst_40 = arith.constant 0.00999999977 : f32
    %62 = vector.broadcast %cst_40 : f32 to vector<16x128xf32>
    %63 = arith.mulf %62, %59 : vector<16x128xf32>
    %64 = arith.select %61, %59, %63 : vector<16x128xi1>, vector<16x128xf32>
    %c0_41 = arith.constant 0 : index
    %c0_42 = arith.constant 0 : index
    %65 = vector.load %arg4[%c0_41, %c0_42] : memref<16x128xf32, #tpu.memory_space<vmem>>, vector<16x128xf32>
    tpu.vector_store %arg4[%c0_41, %c0_42], %64 {strides = array<i32>} : memref<16x128xf32, #tpu.memory_space<vmem>>, vector<16x128xf32>,
    return
  }
  func.func @transform_0(%arg0: i32) -> (i32, i32) {
    %c0_i32 = arith.constant 0 : i32
    %c0_i32_0 = arith.constant 0 : i32
    return %arg0, %c0_i32 : i32, i32
  }
  func.func @transform_1(%arg0: i32) -> (i32, i32, i32) {
    %c0_i32 = arith.constant 0 : i32
    %c0_i32_0 = arith.constant 0 : i32
    %c0_i32_1 = arith.constant 0 : i32
    %c0_i32_2 = arith.constant 0 : i32
    return %c0_i32, %c0_i32_0, %c0_i32_1 : i32, i32, i32
  }
  func.func @transform_2(%arg0: i32) -> (i32, i32, i32) {
    %c0_i32 = arith.constant 0 : i32
    %c0_i32_0 = arith.constant 0 : i32
    %c0_i32_1 = arith.constant 0 : i32
    %c0_i32_2 = arith.constant 0 : i32
    return %c0_i32, %c0_i32_0, %c0_i32_1 : i32, i32, i32
  }
  func.func @transform_3(%arg0: i32) -> (i32, i32) {
    %c0_i32 = arith.constant 0 : i32
    %c0_i32_0 = arith.constant 0 : i32
    return %arg0, %c0_i32 : i32, i32
  }
}

</mosaic_0001>

<llo_original>
// kernel: graph_triple_conv_net.1
$region0: #{graph_triple_conv_net.1}
  #allocation0 [shape = 'u32[]', space=smem, size = 0x4, offset = 0x4, fixed_abs, tag = 'smem constant byte address 0x4 - core index']
  #allocation1 [shape = 'u32[144,128]{1,0:T(1,128)}', space=vmem, size = 0x12000, scoped, tag = 'internal scratch']
  %s0 = inlined_call_operand.vmem [shape: bf16[32,128], index: 0, kind: input, shape index: {}]
  %s1 = inlined_call_operand.vmem [shape: bf16[5,128,128], index: 1, kind: input, shape index: {}]
  %s2 = inlined_call_operand.vmem [shape: f32[5,1,128], index: 2, kind: input, shape index: {}]
  %s3 = inlined_call_operand.vmem [shape: f32[32,128], index: 3, kind: output, shape index: {}]
  %s4 = sld [smem:[#allocation0]]
  $region45: #{graph_triple_conv_net.1} parent=0
    _
  %s6 = ssub.s32 1, %s4
  %s7 = scalar_select 0, %s6, %s4
  loop: start=0, step=1, limit=4
  $region2: #{graph_triple_conv_net.1} parent=0 // loop_pre_header
    _
  $region3: #{graph_triple_conv_net.1} parent=0 // loop_header
    %s9 = sphi 0, %s13
    %p10 = scmp.ge.s32.totalorder %s9, 4
    %s19 = sphi 0, %s21
    %s22 = sphi 0, %s19
    %s23 = sphi 0, %s22
    %s39 = sphi 0, %s23
    %s43 = sphi 0, %s43
    %s45 = sphi 0, %s43
    %s46 = sphi 0, %s45
    %s60 = sphi 0, %s46
    %s64 = sphi 0, %s64
    %s66 = sphi 0, %s64
    %s67 = sphi 0, %s66
    %s81 = sphi 0, %s67
    %s87 = sphi 0, %s89
    %s90 = sphi 0, %s87
    %s91 = sphi 0, %s90
    %s107 = sphi 0, %s91
  $region4: #{graph_triple_conv_net.1} parent=0 // loop_header_branch
    %12 = sbr.rel (%p10) target = $region8
  $region5: #{graph_triple_conv_net.1} parent=0 // loop_body
    %s14 = ssub.s32 %s9, 1
    %s15 = ssub.s32 %s9, 2
    %s16 = sadd.s32 %s9, 1
    %s17 = ssub.s32 %s9, %s16
    %p18 = scmp.eq.s32.totalorder %s17, 0
    %s20 = sadd.s32 %s19, 1
    %s21 = scalar_select %p18, %s19, %s20
    %p24 = pneg %p18
    %p25 = scmp.eq.s32.totalorder %s9, 1
    %p26 = por %p24, %p25
    %p27 = scmp.ne.s32.totalorder %s19, %s22
    %p28 = scmp.eq.s32.totalorder %s9, 0
    %p29 = por %p27, %p28
    %p30 = scmp.ne.s32.totalorder %s19, %s22
    %p31 = scmp.eq.s32.totalorder %s14, 1
    %p32 = por %p30, %p31
    %p33 = scmp.ne.s32.totalorder %s22, %s23
    %p34 = scmp.eq.s32.totalorder %s14, 0
    %p35 = por %p33, %p34
    %p36 = scmp.ne.s32.totalorder %s22, %s23
    %p37 = scmp.eq.s32.totalorder %s15, 1
    %p38 = por %p36, %p37
    %p40 = scmp.ne.s32.totalorder %s23, %s39
    %p41 = scmp.eq.s32.totalorder %s15, 0
    %p42 = por %p40, %p41
    %s44 = sadd.s32 %s43, 1
    %p47 = scmp.eq.s32.totalorder %s9, 1
    %p48 = scmp.ne.s32.totalorder %s43, %s45
    %p49 = scmp.eq.s32.totalorder %s9, 0
    %p50 = por %p48, %p49
    %p51 = scmp.ne.s32.totalorder %s43, %s45
    %p52 = scmp.eq.s32.totalorder %s14, 1
    %p53 = por %p51, %p52
    %p54 = scmp.ne.s32.totalorder %s45, %s46
    %p55 = scmp.eq.s32.totalorder %s14, 0
    %p56 = por %p54, %p55
    %p57 = scmp.ne.s32.totalorder %s45, %s46
    %p58 = scmp.eq.s32.totalorder %s15, 1
    %p59 = por %p57, %p58
    %p61 = scmp.ne.s32.totalorder %s46, %s60
    %p62 = scmp.eq.s32.totalorder %s15, 0
    %p63 = por %p61, %p62
    %s65 = sadd.s32 %s64, 1
    %p68 = scmp.eq.s32.totalorder %s9, 1
    %p69 = scmp.ne.s32.totalorder %s64, %s66
    %p70 = scmp.eq.s32.totalorder %s9, 0
    %p71 = por %p69, %p70
    %p72 = scmp.ne.s32.totalorder %s64, %s66
    %p73 = scmp.eq.s32.totalorder %s14, 1
    %p74 = por %p72, %p73
    %p75 = scmp.ne.s32.totalorder %s66, %s67
    %p76 = scmp.eq.s32.totalorder %s14, 0
    %p77 = por %p75, %p76
    %p78 = scmp.ne.s32.totalorder %s66, %s67
    %p79 = scmp.eq.s32.totalorder %s15, 1
    %p80 = por %p78, %p79
    %p82 = scmp.ne.s32.totalorder %s67, %s81
    %p83 = scmp.eq.s32.totalorder %s15, 0
    %p84 = por %p82, %p83
    %s85 = ssub.s32 %s9, %s16
    %p86 = scmp.eq.s32.totalorder %s85, 0
    %s88 = sadd.s32 %s87, 1
    %s89 = scalar_select %p86, %s87, %s88
    %p92 = pneg %p86
    %p93 = scmp.eq.s32.totalorder %s9, 1
    %p94 = por %p92, %p93
    %p95 = scmp.ne.s32.totalorder %s87, %s90
    %p96 = scmp.eq.s32.totalorder %s9, 0
    %p97 = por %p95, %p96
    %p98 = scmp.ne.s32.totalorder %s87, %s90
    %p99 = scmp.eq.s32.totalorder %s14, 1
    %p100 = por %p98, %p99
    %p101 = scmp.ne.s32.totalorder %s90, %s91
    %p102 = scmp.eq.s32.totalorder %s14, 0
    %p103 = por %p101, %p102
    %p104 = scmp.ne.s32.totalorder %s90, %s91
    %p105 = scmp.eq.s32.totalorder %s15, 1
    %p106 = por %p104, %p105
    %p108 = scmp.ne.s32.totalorder %s91, %s107
    %p109 = scmp.eq.s32.totalorder %s15, 0
    %p110 = por %p108, %p109
    %p111 = scmp.le.s32.totalorder 1, %s9
    %p112 = scmp.lt.s32.totalorder %s9, 3
    %p113 = pnand %p111, %p112
    %p114 = pneg %p113
    // Predicated region
    $region9: #{graph_triple_conv_net.1} parent=5 // pred_check
      _
    $region10: #{graph_triple_conv_net.1} parent=5 // pred_check_branch
      %116 = sbr.rel (%p113) target = $region12
    $region11: #{graph_triple_conv_net.1} parent=5 // pred_region
      %s117 = ssub.s32 %s9, 1
      // Predicated region
      $region13: #{graph_triple_conv_net.1} parent=11 // pred_check
        %p118 = pneg %p56
      $region14: #{graph_triple_conv_net.1} parent=11 // pred_check_branch
        %120 = sbr.rel (%p118) target = $region16
      $region15: #{graph_triple_conv_net.1} parent=11 // pred_region
        _
      $region16: #{graph_triple_conv_net.1} parent=11 // pred_fallthru
        _
      // Predicated region
      $region17: #{graph_triple_conv_net.1} parent=11 // pred_check
        %p121 = pneg %p77
      $region18: #{graph_triple_conv_net.1} parent=11 // pred_check_branch
        %123 = sbr.rel (%p121) target = $region20
      $region19: #{graph_triple_conv_net.1} parent=11 // pred_region
        _
      $region20: #{graph_triple_conv_net.1} parent=11 // pred_fallthru
        _
    $region12: #{graph_triple_conv_net.1} parent=5 // pred_fallthru
      _
    %p124 = scmp.lt.s32.totalorder %s9, 2
    // Predicated region
    $region21: #{graph_triple_conv_net.1} parent=5 // pred_check
      %p125 = pneg %p124
    $region22: #{graph_triple_conv_net.1} parent=5 // pred_check_branch
      %127 = sbr.rel (%p125) target = $region24
    $region23: #{graph_triple_conv_net.1} parent=5 // pred_region
      // Predicated region
      $region25: #{graph_triple_conv_net.1} parent=23 // pred_check
        %p128 = pneg %p29
      $region26: #{graph_triple_conv_net.1} parent=23 // pred_check_branch
        %130 = sbr.rel (%p128) target = $region28
      $region27: #{graph_triple_conv_net.1} parent=23 // pred_region
        %s131 = smul.u32 2, %s9
        %p132 = scmp.lt.s32.totalorder %s131, 3
        %s133 = scalar_select %p132, %s131, 3
        %s134 = smul.addr %s133, 4
        %s135 = scalar_lea.vmem %s0, %s134
        %s136 = smul.u32 2, %s9
      $region28: #{graph_triple_conv_net.1} parent=23 // pred_fallthru
        _
    $region24: #{graph_triple_conv_net.1} parent=5 // pred_fallthru
      _
    %p137 = scmp.le.s32.totalorder 1, %s9
    %p138 = scmp.lt.s32.totalorder %s9, 3
    %p139 = pnand %p137, %p138
    %p140 = pneg %p139
    // Predicated region
    $region29: #{graph_triple_conv_net.1} parent=5 // pred_check
      _
    $region30: #{graph_triple_conv_net.1} parent=5 // pred_check_branch
      %142 = sbr.rel (%p139) target = $region32
    $region31: #{graph_triple_conv_net.1} parent=5 // pred_region
      %s143 = ssub.s32 %s9, 1
      %s144 = smul.u32 2, %s14
      %p145 = scmp.lt.s32.totalorder %s144, 3
      %s146 = scalar_select %p145, %s144, 3
      %s147 = smul.addr %s146, 4
      %s148 = scalar_lea.vmem %s0, %s147
      %p149 = pneg %p35
      %p150 = pneg %p32
      %p151 = pneg %p56
      %p152 = pneg %p53
      %p153 = pneg %p77
      %p154 = pneg %p74
      %p155 = pneg %p103
      %p156 = pneg %p100
      %s157 = smul.u32 2, %s14
      %p158 = scmp.lt.s32.totalorder %s157, 3
      %s159 = scalar_select %p158, %s157, 3
      %s160 = smul.addr %s159, 8
      %s161 = scalar_lea.vmem %s3, %s160
      %s162 = smul.u32 2, %s14
      %p163 = scmp.lt.s32.totalorder %s162, 3
      %s164 = scalar_select %p163, %s162, 3
      %s165 = smul.addr %s164, 4
      %s166 = scalar_lea.vmem %s0, %s165
      %s167 = smul.u32 2, %s14
      %s168 = smul.u32 2, %s14
      %p169 = scmp.lt.s32.totalorder %s168, 3
      %s170 = scalar_select %p169, %s168, 3
      %s171 = smul.addr %s170, 8
      %s172 = scalar_lea.vmem %s3, %s171
      %s173 = smul.u32 2, %s14
      %v175 = vld [vmem:[%s166] sm:$0xf]
      %v176 = vld [vmem:[%s166 + $0x4] sm:$0xf]
      %v177 = vld [vmem:[%s1] sm:$0xf]
      %v178 = vld [vmem:[%s1 + $0x4] sm:$0xf]
      %v179 = vld [vmem:[%s1 + $0x8] sm:$0xf]
      %v180 = vld [vmem:[%s1 + $0xc] sm:$0xf]
      %v181 = vld [vmem:[%s1 + $0x10] sm:$0xf]
      %v182 = vld [vmem:[%s1 + $0x14] sm:$0xf]
      %v183 = vld [vmem:[%s1 + $0x18] sm:$0xf]
      %v184 = vld [vmem:[%s1 + $0x1c] sm:$0xf]
      %v185 = vld [vmem:[%s1 + $0x20] sm:$0xf]
      %v186 = vld [vmem:[%s1 + $0x24] sm:$0xf]
      %v187 = vld [vmem:[%s1 + $0x28] sm:$0xf]
      %v188 = vld [vmem:[%s1 + $0x2c] sm:$0xf]
      %v189 = vld [vmem:[%s1 + $0x30] sm:$0xf]
      %v190 = vld [vmem:[%s1 + $0x34] sm:$0xf]
      %v191 = vld [vmem:[%s1 + $0x38] sm:$0xf]
      %v192 = vld [vmem:[%s1 + $0x3c] sm:$0xf]
      %v193 = vld [vmem:[%s2] sm:$0x1]
      %v195 = vlaneseq
      %v196 = vshrl.u32 %v195, 7
      %v197 = vsub.s32 0, %v196
      %v198 = vrot.slane %v193, %v197
      %v202 = vunpack.c.l.b16 %v175
      %v203 = vunpack.c.l.b16 %v176
      %v204 = vpack.c.b16 %v203, %v202
      %v222 = vunpack.c.l.b16 %v177
      %v223 = vunpack.c.l.b16 %v178
      %v224 = vunpack.c.l.b16 %v179
      %v225 = vunpack.c.l.b16 %v180
      %v226 = vunpack.c.l.b16 %v181
      %v227 = vunpack.c.l.b16 %v182
      %v228 = vunpack.c.l.b16 %v183
      %v229 = vunpack.c.l.b16 %v184
      %v230 = vunpack.c.l.b16 %v185
      %v231 = vunpack.c.l.b16 %v186
      %v232 = vunpack.c.l.b16 %v187
      %v233 = vunpack.c.l.b16 %v188
      %v234 = vunpack.c.l.b16 %v189
      %v235 = vunpack.c.l.b16 %v190
      %v236 = vunpack.c.l.b16 %v191
      %v237 = vunpack.c.l.b16 %v192
      %v238 = vpack.c.b16 %v223, %v222
      %v239 = vpack.c.b16 %v225, %v224
      %v240 = vpack.c.b16 %v227, %v226
      %v241 = vpack.c.b16 %v229, %v228
      %v242 = vpack.c.b16 %v231, %v230
      %v243 = vpack.c.b16 %v233, %v232
      %v244 = vpack.c.b16 %v235, %v234
      %v245 = vpack.c.b16 %v237, %v236
      %254 = vmatprep.subr.bf16.mxu0 0
      %255 = vmatpush1.bf16.msra.mxu0 %v238
      %256 = vmatprep.subr.bf16.mxu0 0
      %257 = vmatpush1.bf16.msra.mxu0 %v239
      %258 = vmatprep.subr.bf16.mxu0 0
      %259 = vmatpush1.bf16.msra.mxu0 %v240
      %260 = vmatprep.subr.bf16.mxu0 0
      %261 = vmatpush1.bf16.msra.mxu0 %v241
      %262 = vmatprep.subr.bf16.mxu0 0
      %263 = vmatpush1.bf16.msra.mxu0 %v242
      %264 = vmatprep.subr.bf16.mxu0 0
      %265 = vmatpush1.bf16.msra.mxu0 %v243
      %266 = vmatprep.subr.bf16.mxu0 0
      %267 = vmatpush1.bf16.msra.mxu0 %v244
      %268 = vmatprep.subr.bf16.mxu0 0
      %269 = vmatpush1.bf16.msra.mxu0 %v245
      %270 = vmatprep.subr.bf16.mxu0 0
      %271 = vmatpush1.bf16.msra.mxu0 0
      %272 = vmatprep.subr.bf16.mxu0 0
      %273 = vmatpush1.bf16.msra.mxu0 0
      %274 = vmatprep.subr.bf16.mxu0 0
      %275 = vmatpush1.bf16.msra.mxu0 0
      %276 = vmatprep.subr.bf16.mxu0 0
      %277 = vmatpush1.bf16.msra.mxu0 0
      %278 = vmatprep.subr.bf16.mxu0 0
      %279 = vmatpush1.bf16.msra.mxu0 0
      %280 = vmatprep.subr.bf16.mxu0 0
      %281 = vmatpush1.bf16.msra.mxu0 0
      %282 = vmatprep.subr.bf16.mxu0 0
      %283 = vmatpush1.bf16.msra.mxu0 0
      %284 = vmatprep.subr.bf16.mxu0 0
      %285 = vmatpush1.bf16.msra.mxu0 0
      %286 = vmatprep.mubr.bf16.mxu0 0
      %287 = vmatmul.mubr.bf16.gmra.mrb[0].mxu0 %v204
      %v288 = vpop.f32.mrb[0].mxu0
      %v289 = vadd.f32 %v198, %v288
      %v290 = vpop.f32.mrb[0].mxu0
      %v291 = vpop.f32.mrb[0].mxu0
      %v292 = vadd.f32 %v198, %v291
      %v293 = vpop.f32.mrb[0].mxu0
      %294 = vdwg.mxu0
      %vm295 = vcmp.ge.f32.partialorder %v289, 0.0
      %vm296 = vcmp.ge.f32.partialorder %v292, 0.0
      %v297 = vmul.f32 %v289, 0.01
      %v298 = vmul.f32 %v292, 0.01
      %v299 = vsel %vm295, %v289, %v297
      %v300 = vsel %vm296, %v292, %v298
      %v301 = vpack.c.bf16 %v300, %v299
      %s302 = scalar_lea.vmem %s1, 64
      %v303 = vld [vmem:[%s302] sm:$0xf]
      %v304 = vld [vmem:[%s302 + $0x4] sm:$0xf]
      %v305 = vld [vmem:[%s302 + $0x8] sm:$0xf]
      %v306 = vld [vmem:[%s302 + $0xc] sm:$0xf]
      %v307 = vld [vmem:[%s302 + $0x10] sm:$0xf]
      %v308 = vld [vmem:[%s302 + $0x14] sm:$0xf]
      %v309 = vld [vmem:[%s302 + $0x18] sm:$0xf]
      %v310 = vld [vmem:[%s302 + $0x1c] sm:$0xf]
      %v311 = vld [vmem:[%s302 + $0x20] sm:$0xf]
      %v312 = vld [vmem:[%s302 + $0x24] sm:$0xf]
      %v313 = vld [vmem:[%s302 + $0x28] sm:$0xf]
      %v314 = vld [vmem:[%s302 + $0x2c] sm:$0xf]
      %v315 = vld [vmem:[%s302 + $0x30] sm:$0xf]
      %v316 = vld [vmem:[%s302 + $0x34] sm:$0xf]
      %v317 = vld [vmem:[%s302 + $0x38] sm:$0xf]
      %v318 = vld [vmem:[%s302 + $0x3c] sm:$0xf]
      %s319 = scalar_lea.vmem %s2, 1
      %v320 = vld [vmem:[%s319] sm:$0x1]
      %v322 = vlaneseq
      %v323 = vshrl.u32 %v322, 7
      %v324 = vsub.s32 0, %v323
      %v325 = vrot.slane %v320, %v324
      %v343 = vunpack.c.l.b16 %v303
      %v344 = vunpack.c.l.b16 %v304
      %v345 = vunpack.c.l.b16 %v305
      %v346 = vunpack.c.l.b16 %v306
      %v347 = vunpack.c.l.b16 %v307
      %v348 = vunpack.c.l.b16 %v308
      %v349 = vunpack.c.l.b16 %v309
      %v350 = vunpack.c.l.b16 %v310
      %v351 = vunpack.c.l.b16 %v311
      %v352 = vunpack.c.l.b16 %v312
      %v353 = vunpack.c.l.b16 %v313
      %v354 = vunpack.c.l.b16 %v314
      %v355 = vunpack.c.l.b16 %v315
      %v356 = vunpack.c.l.b16 %v316
      %v357 = vunpack.c.l.b16 %v317
      %v358 = vunpack.c.l.b16 %v318
      %v359 = vpack.c.b16 %v344, %v343
      %v360 = vpack.c.b16 %v346, %v345
      %v361 = vpack.c.b16 %v348, %v347
      %v362 = vpack.c.b16 %v350, %v349
      %v363 = vpack.c.b16 %v352, %v351
      %v364 = vpack.c.b16 %v354, %v353
      %v365 = vpack.c.b16 %v356, %v355
      %v366 = vpack.c.b16 %v358, %v357
      %375 = vmatprep.subr.bf16.mxu0 0
      %376 = vmatpush1.bf16.msra.mxu0 %v359
      %377 = vmatprep.subr.bf16.mxu0 0
      %378 = vmatpush1.bf16.msra.mxu0 %v360
      %379 = vmatprep.subr.bf16.mxu0 0
      %380 = vmatpush1.bf16.msra.mxu0 %v361
      %381 = vmatprep.subr.bf16.mxu0 0
      %382 = vmatpush1.bf16.msra.mxu0 %v362
      %383 = vmatprep.subr.bf16.mxu0 0
      %384 = vmatpush1.bf16.msra.mxu0 %v363
      %385 = vmatprep.subr.bf16.mxu0 0
      %386 = vmatpush1.bf16.msra.mxu0 %v364
      %387 = vmatprep.subr.bf16.mxu0 0
      %388 = vmatpush1.bf16.msra.mxu0 %v365
      %389 = vmatprep.subr.bf16.mxu0 0
      %390 = vmatpush1.bf16.msra.mxu0 %v366
      %391 = vmatprep.subr.bf16.mxu0 0
      %392 = vmatpush1.bf16.msra.mxu0 0
      %393 = vmatprep.subr.bf16.mxu0 0
      %394 = vmatpush1.bf16.msra.mxu0 0
      %395 = vmatprep.subr.bf16.mxu0 0
      %396 = vmatpush1.bf16.msra.mxu0 0
      %397 = vmatprep.subr.bf16.mxu0 0
      %398 = vmatpush1.bf16.msra.mxu0 0
      %399 = vmatprep.subr.bf16.mxu0 0
      %400 = vmatpush1.bf16.msra.mxu0 0
      %401 = vmatprep.subr.bf16.mxu0 0
      %402 = vmatpush1.bf16.msra.mxu0 0
      %403 = vmatprep.subr.bf16.mxu0 0
      %404 = vmatpush1.bf16.msra.mxu0 0
      %405 = vmatprep.subr.bf16.mxu0 0
      %406 = vmatpush1.bf16.msra.mxu0 0
      %407 = vmatprep.mubr.bf16.mxu0 0
      %408 = vmatmul.mubr.bf16.gmra.mrb[0].mxu0 %v301
      %v409 = vpop.f32.mrb[0].mxu0
      %v410 = vadd.f32 %v325, %v409
      %v411 = vpop.f32.mrb[0].mxu0
      %v412 = vpop.f32.mrb[0].mxu0
      %v413 = vadd.f32 %v325, %v412
      %v414 = vpop.f32.mrb[0].mxu0
      %415 = vdwg.mxu0
      %vm416 = vcmp.ge.f32.partialorder %v410, 0.0
      %vm417 = vcmp.ge.f32.partialorder %v413, 0.0
      %v418 = vmul.f32 %v410, 0.01
      %v419 = vmul.f32 %v413, 0.01
      %v420 = vsel %vm416, %v410, %v418
      %v421 = vsel %vm417, %v413, %v419
      %v422 = vpack.c.bf16 %v421, %v420
      %s423 = scalar_lea.vmem %s1, 128
      %v424 = vld [vmem:[%s423] sm:$0xf]
      %v425 = vld [vmem:[%s423 + $0x4] sm:$0xf]
      %v426 = vld [vmem:[%s423 + $0x8] sm:$0xf]
      %v427 = vld [vmem:[%s423 + $0xc] sm:$0xf]
      %v428 = vld [vmem:[%s423 + $0x10] sm:$0xf]
      %v429 = vld [vmem:[%s423 + $0x14] sm:$0xf]
      %v430 = vld [vmem:[%s423 + $0x18] sm:$0xf]
      %v431 = vld [vmem:[%s423 + $0x1c] sm:$0xf]
      %v432 = vld [vmem:[%s423 + $0x20] sm:$0xf]
      %v433 = vld [vmem:[%s423 + $0x24] sm:$0xf]
      %v434 = vld [vmem:[%s423 + $0x28] sm:$0xf]
      %v435 = vld [vmem:[%s423 + $0x2c] sm:$0xf]
      %v436 = vld [vmem:[%s423 + $0x30] sm:$0xf]
      %v437 = vld [vmem:[%s423 + $0x34] sm:$0xf]
      %v438 = vld [vmem:[%s423 + $0x38] sm:$0xf]
      %v439 = vld [vmem:[%s423 + $0x3c] sm:$0xf]
      %s440 = scalar_lea.vmem %s2, 2
      %v441 = vld [vmem:[%s440] sm:$0x1]
      %v443 = vlaneseq
      %v444 = vshrl.u32 %v443, 7
      %v445 = vsub.s32 0, %v444
      %v446 = vrot.slane %v441, %v445
      %v464 = vunpack.c.l.b16 %v424
      %v465 = vunpack.c.l.b16 %v425
      %v466 = vunpack.c.l.b16 %v426
      %v467 = vunpack.c.l.b16 %v427
      %v468 = vunpack.c.l.b16 %v428
      %v469 = vunpack.c.l.b16 %v429
      %v470 = vunpack.c.l.b16 %v430
      %v471 = vunpack.c.l.b16 %v431
      %v472 = vunpack.c.l.b16 %v432
      %v473 = vunpack.c.l.b16 %v433
      %v474 = vunpack.c.l.b16 %v434
      %v475 = vunpack.c.l.b16 %v435
      %v476 = vunpack.c.l.b16 %v436
      %v477 = vunpack.c.l.b16 %v437
      %v478 = vunpack.c.l.b16 %v438
      %v479 = vunpack.c.l.b16 %v439
      %v480 = vpack.c.b16 %v465, %v464
      %v481 = vpack.c.b16 %v467, %v466
      %v482 = vpack.c.b16 %v469, %v468
      %v483 = vpack.c.b16 %v471, %v470
      %v484 = vpack.c.b16 %v473, %v472
      %v485 = vpack.c.b16 %v475, %v474
      %v486 = vpack.c.b16 %v477, %v476
      %v487 = vpack.c.b16 %v479, %v478
      %496 = vmatprep.subr.bf16.mxu0 0
      %497 = vmatpush1.bf16.msra.mxu0 %v480
      %498 = vmatprep.subr.bf16.mxu0 0
      %499 = vmatpush1.bf16.msra.mxu0 %v481
      %500 = vmatprep.subr.bf16.mxu0 0
      %501 = vmatpush1.bf16.msra.mxu0 %v482
      %502 = vmatprep.subr.bf16.mxu0 0
      %503 = vmatpush1.bf16.msra.mxu0 %v483
      %504 = vmatprep.subr.bf16.mxu0 0
      %505 = vmatpush1.bf16.msra.mxu0 %v484
      %506 = vmatprep.subr.bf16.mxu0 0
      %507 = vmatpush1.bf16.msra.mxu0 %v485
      %508 = vmatprep.subr.bf16.mxu0 0
      %509 = vmatpush1.bf16.msra.mxu0 %v486
      %510 = vmatprep.subr.bf16.mxu0 0
      %511 = vmatpush1.bf16.msra.mxu0 %v487
      %512 = vmatprep.subr.bf16.mxu0 0
      %513 = vmatpush1.bf16.msra.mxu0 0
      %514 = vmatprep.subr.bf16.mxu0 0
      %515 = vmatpush1.bf16.msra.mxu0 0
      %516 = vmatprep.subr.bf16.mxu0 0
      %517 = vmatpush1.bf16.msra.mxu0 0
      %518 = vmatprep.subr.bf16.mxu0 0
      %519 = vmatpush1.bf16.msra.mxu0 0
      %520 = vmatprep.subr.bf16.mxu0 0
      %521 = vmatpush1.bf16.msra.mxu0 0
      %522 = vmatprep.subr.bf16.mxu0 0
      %523 = vmatpush1.bf16.msra.mxu0 0
      %524 = vmatprep.subr.bf16.mxu0 0
      %525 = vmatpush1.bf16.msra.mxu0 0
      %526 = vmatprep.subr.bf16.mxu0 0
      %527 = vmatpush1.bf16.msra.mxu0 0
      %528 = vmatprep.mubr.bf16.mxu0 0
      %529 = vmatmul.mubr.bf16.gmra.mrb[0].mxu0 %v422
      %v530 = vpop.f32.mrb[0].mxu0
      %v531 = vadd.f32 %v446, %v530
      %v532 = vpop.f32.mrb[0].mxu0
      %v533 = vpop.f32.mrb[0].mxu0
      %v534 = vadd.f32 %v446, %v533
      %v535 = vpop.f32.mrb[0].mxu0
      %536 = vdwg.mxu0
      %vm537 = vcmp.ge.f32.partialorder %v531, 0.0
      %vm538 = vcmp.ge.f32.partialorder %v534, 0.0
      %v539 = vmul.f32 %v531, 0.01
      %v540 = vmul.f32 %v534, 0.01
      %v541 = vsel %vm537, %v531, %v539
      %v542 = vsel %vm538, %v534, %v540
      %v543 = vpack.c.bf16 %v542, %v541
      %s544 = scalar_lea.vmem %s1, 192
      %v545 = vld [vmem:[%s544] sm:$0xf]
      %v546 = vld [vmem:[%s544 + $0x4] sm:$0xf]
      %v547 = vld [vmem:[%s544 + $0x8] sm:$0xf]
      %v548 = vld [vmem:[%s544 + $0xc] sm:$0xf]
      %v549 = vld [vmem:[%s544 + $0x10] sm:$0xf]
      %v550 = vld [vmem:[%s544 + $0x14] sm:$0xf]
      %v551 = vld [vmem:[%s544 + $0x18] sm:$0xf]
      %v552 = vld [vmem:[%s544 + $0x1c] sm:$0xf]
      %v553 = vld [vmem:[%s544 + $0x20] sm:$0xf]
      %v554 = vld [vmem:[%s544 + $0x24] sm:$0xf]
      %v555 = vld [vmem:[%s544 + $0x28] sm:$0xf]
      %v556 = vld [vmem:[%s544 + $0x2c] sm:$0xf]
      %v557 = vld [vmem:[%s544 + $0x30] sm:$0xf]
      %v558 = vld [vmem:[%s544 + $0x34] sm:$0xf]
      %v559 = vld [vmem:[%s544 + $0x38] sm:$0xf]
      %v560 = vld [vmem:[%s544 + $0x3c] sm:$0xf]
      %s561 = scalar_lea.vmem %s2, 3
      %v562 = vld [vmem:[%s561] sm:$0x1]
      %v564 = vlaneseq
      %v565 = vshrl.u32 %v564, 7
      %v566 = vsub.s32 0, %v565
      %v567 = vrot.slane %v562, %v566
      %v585 = vunpack.c.l.b16 %v545
      %v586 = vunpack.c.l.b16 %v546
      %v587 = vunpack.c.l.b16 %v547
      %v588 = vunpack.c.l.b16 %v548
      %v589 = vunpack.c.l.b16 %v549
      %v590 = vunpack.c.l.b16 %v550
      %v591 = vunpack.c.l.b16 %v551
      %v592 = vunpack.c.l.b16 %v552
      %v593 = vunpack.c.l.b16 %v553
      %v594 = vunpack.c.l.b16 %v554
      %v595 = vunpack.c.l.b16 %v555
      %v596 = vunpack.c.l.b16 %v556
      %v597 = vunpack.c.l.b16 %v557
      %v598 = vunpack.c.l.b16 %v558
      %v599 = vunpack.c.l.b16 %v559
      %v600 = vunpack.c.l.b16 %v560
      %v601 = vpack.c.b16 %v586, %v585
      %v602 = vpack.c.b16 %v588, %v587
      %v603 = vpack.c.b16 %v590, %v589
      %v604 = vpack.c.b16 %v592, %v591
      %v605 = vpack.c.b16 %v594, %v593
      %v606 = vpack.c.b16 %v596, %v595
      %v607 = vpack.c.b16 %v598, %v597
      %v608 = vpack.c.b16 %v600, %v599
      %617 = vmatprep.subr.bf16.mxu0 0
      %618 = vmatpush1.bf16.msra.mxu0 %v601
      %619 = vmatprep.subr.bf16.mxu0 0
      %620 = vmatpush1.bf16.msra.mxu0 %v602
      %621 = vmatprep.subr.bf16.mxu0 0
      %622 = vmatpush1.bf16.msra.mxu0 %v603
      %623 = vmatprep.subr.bf16.mxu0 0
      %624 = vmatpush1.bf16.msra.mxu0 %v604
      %625 = vmatprep.subr.bf16.mxu0 0
      %626 = vmatpush1.bf16.msra.mxu0 %v605
      %627 = vmatprep.subr.bf16.mxu0 0
      %628 = vmatpush1.bf16.msra.mxu0 %v606
      %629 = vmatprep.subr.bf16.mxu0 0
      %630 = vmatpush1.bf16.msra.mxu0 %v607
      %631 = vmatprep.subr.bf16.mxu0 0
      %632 = vmatpush1.bf16.msra.mxu0 %v608
      %633 = vmatprep.subr.bf16.mxu0 0
      %634 = vmatpush1.bf16.msra.mxu0 0
      %635 = vmatprep.subr.bf16.mxu0 0
      %636 = vmatpush1.bf16.msra.mxu0 0
      %637 = vmatprep.subr.bf16.mxu0 0
      %638 = vmatpush1.bf16.msra.mxu0 0
      %639 = vmatprep.subr.bf16.mxu0 0
      %640 = vmatpush1.bf16.msra.mxu0 0
      %641 = vmatprep.subr.bf16.mxu0 0
      %642 = vmatpush1.bf16.msra.mxu0 0
      %643 = vmatprep.subr.bf16.mxu0 0
      %644 = vmatpush1.bf16.msra.mxu0 0
      %645 = vmatprep.subr.bf16.mxu0 0
      %646 = vmatpush1.bf16.msra.mxu0 0
      %647 = vmatprep.subr.bf16.mxu0 0
      %648 = vmatpush1.bf16.msra.mxu0 0
      %649 = vmatprep.mubr.bf16.mxu0 0
      %650 = vmatmul.mubr.bf16.gmra.mrb[0].mxu0 %v543
      %v651 = vpop.f32.mrb[0].mxu0
      %v652 = vadd.f32 %v567, %v651
      %v653 = vpop.f32.mrb[0].mxu0
      %v654 = vpop.f32.mrb[0].mxu0
      %v655 = vadd.f32 %v567, %v654
      %v656 = vpop.f32.mrb[0].mxu0
      %657 = vdwg.mxu0
      %vm658 = vcmp.ge.f32.partialorder %v652, 0.0
      %vm659 = vcmp.ge.f32.partialorder %v655, 0.0
      %v660 = vmul.f32 %v652, 0.01
      %v661 = vmul.f32 %v655, 0.01
      %v662 = vsel %vm658, %v652, %v660
      %v663 = vsel %vm659, %v655, %v661
      %v664 = vpack.c.bf16 %v663, %v662
      %s665 = scalar_lea.vmem %s1, 256
      %v666 = vld [vmem:[%s665] sm:$0xf]
      %v667 = vld [vmem:[%s665 + $0x4] sm:$0xf]
      %v668 = vld [vmem:[%s665 + $0x8] sm:$0xf]
      %v669 = vld [vmem:[%s665 + $0xc] sm:$0xf]
      %v670 = vld [vmem:[%s665 + $0x10] sm:$0xf]
      %v671 = vld [vmem:[%s665 + $0x14] sm:$0xf]
      %v672 = vld [vmem:[%s665 + $0x18] sm:$0xf]
      %v673 = vld [vmem:[%s665 + $0x1c] sm:$0xf]
      %v674 = vld [vmem:[%s665 + $0x20] sm:$0xf]
      %v675 = vld [vmem:[%s665 + $0x24] sm:$0xf]
      %v676 = vld [vmem:[%s665 + $0x28] sm:$0xf]
      %v677 = vld [vmem:[%s665 + $0x2c] sm:$0xf]
      %v678 = vld [vmem:[%s665 + $0x30] sm:$0xf]
      %v679 = vld [vmem:[%s665 + $0x34] sm:$0xf]
      %v680 = vld [vmem:[%s665 + $0x38] sm:$0xf]
      %v681 = vld [vmem:[%s665 + $0x3c] sm:$0xf]
      %s682 = scalar_lea.vmem %s2, 4
      %v683 = vld [vmem:[%s682] sm:$0x1]
      %v685 = vlaneseq
      %v686 = vshrl.u32 %v685, 7
      %v687 = vsub.s32 0, %v686
      %v688 = vrot.slane %v683, %v687
      %v706 = vunpack.c.l.b16 %v666
      %v707 = vunpack.c.l.b16 %v667
      %v708 = vunpack.c.l.b16 %v668
      %v709 = vunpack.c.l.b16 %v669
      %v710 = vunpack.c.l.b16 %v670
      %v711 = vunpack.c.l.b16 %v671
      %v712 = vunpack.c.l.b16 %v672
      %v713 = vunpack.c.l.b16 %v673
      %v714 = vunpack.c.l.b16 %v674
      %v715 = vunpack.c.l.b16 %v675
      %v716 = vunpack.c.l.b16 %v676
      %v717 = vunpack.c.l.b16 %v677
      %v718 = vunpack.c.l.b16 %v678
      %v719 = vunpack.c.l.b16 %v679
      %v720 = vunpack.c.l.b16 %v680
      %v721 = vunpack.c.l.b16 %v681
      %v722 = vpack.c.b16 %v707, %v706
      %v723 = vpack.c.b16 %v709, %v708
      %v724 = vpack.c.b16 %v711, %v710
      %v725 = vpack.c.b16 %v713, %v712
      %v726 = vpack.c.b16 %v715, %v714
      %v727 = vpack.c.b16 %v717, %v716
      %v728 = vpack.c.b16 %v719, %v718
      %v729 = vpack.c.b16 %v721, %v720
      %738 = vmatprep.subr.bf16.mxu0 0
      %739 = vmatpush1.bf16.msra.mxu0 %v722
      %740 = vmatprep.subr.bf16.mxu0 0
      %741 = vmatpush1.bf16.msra.mxu0 %v723
      %742 = vmatprep.subr.bf16.mxu0 0
      %743 = vmatpush1.bf16.msra.mxu0 %v724
      %744 = vmatprep.subr.bf16.mxu0 0
      %745 = vmatpush1.bf16.msra.mxu0 %v725
      %746 = vmatprep.subr.bf16.mxu0 0
      %747 = vmatpush1.bf16.msra.mxu0 %v726
      %748 = vmatprep.subr.bf16.mxu0 0
      %749 = vmatpush1.bf16.msra.mxu0 %v727
      %750 = vmatprep.subr.bf16.mxu0 0
      %751 = vmatpush1.bf16.msra.mxu0 %v728
      %752 = vmatprep.subr.bf16.mxu0 0
      %753 = vmatpush1.bf16.msra.mxu0 %v729
      %754 = vmatprep.subr.bf16.mxu0 0
      %755 = vmatpush1.bf16.msra.mxu0 0
      %756 = vmatprep.subr.bf16.mxu0 0
      %757 = vmatpush1.bf16.msra.mxu0 0
      %758 = vmatprep.subr.bf16.mxu0 0
      %759 = vmatpush1.bf16.msra.mxu0 0
      %760 = vmatprep.subr.bf16.mxu0 0
      %761 = vmatpush1.bf16.msra.mxu0 0
      %762 = vmatprep.subr.bf16.mxu0 0
      %763 = vmatpush1.bf16.msra.mxu0 0
      %764 = vmatprep.subr.bf16.mxu0 0
      %765 = vmatpush1.bf16.msra.mxu0 0
      %766 = vmatprep.subr.bf16.mxu0 0
      %767 = vmatpush1.bf16.msra.mxu0 0
      %768 = vmatprep.subr.bf16.mxu0 0
      %769 = vmatpush1.bf16.msra.mxu0 0
      %770 = vmatprep.mubr.bf16.mxu0 0
      %771 = vmatmul.mubr.bf16.gmra.mrb[0].mxu0 %v664
      %v772 = vpop.f32.mrb[0].mxu0
      %v773 = vadd.f32 %v688, %v772
      %v774 = vpop.f32.mrb[0].mxu0
      %v775 = vpop.f32.mrb[0].mxu0
      %v776 = vadd.f32 %v688, %v775
      %v777 = vpop.f32.mrb[0].mxu0
      %778 = vdwg.mxu0
      %vm779 = vcmp.ge.f32.partialorder %v773, 0.0
      %vm780 = vcmp.ge.f32.partialorder %v776, 0.0
      %v781 = vmul.f32 %v773, 0.01
      %v782 = vmul.f32 %v776, 0.01
      %v783 = vsel %vm779, %v773, %v781
      %v784 = vsel %vm780, %v776, %v782
      %785 = vst [vmem:[%s172] sm:$0xff] %v783
      %786 = vst [vmem:[%s172 + $0x8] sm:$0xff] %v784
      %s787 = smul.u32 2, %s14
      %p788 = scmp.lt.s32.totalorder %s787, 3
      %s789 = scalar_select %p788, %s787, 3
      %s790 = smul.addr %s789, 8
      %s791 = scalar_lea.vmem %s3, %s790
      // Predicated region
      $region33: #{graph_triple_conv_net.1} parent=31 // pred_check
        %p792 = pneg %p100
      $region34: #{graph_triple_conv_net.1} parent=31 // pred_check_branch
        %794 = sbr.rel (%p792) target = $region36
      $region35: #{graph_triple_conv_net.1} parent=31 // pred_region
        %s795 = smul.u32 2, %s14
      $region36: #{graph_triple_conv_net.1} parent=31 // pred_fallthru
        _
    $region32: #{graph_triple_conv_net.1} parent=5 // pred_fallthru
      _
    %p796 = scmp.le.s32.totalorder 2, %s9
    // Predicated region
    $region37: #{graph_triple_conv_net.1} parent=5 // pred_check
      %p797 = pneg %p796
    $region38: #{graph_triple_conv_net.1} parent=5 // pred_check_branch
      %799 = sbr.rel (%p797) target = $region40
    $region39: #{graph_triple_conv_net.1} parent=5 // pred_region
      %s800 = ssub.s32 %s9, 2
      // Predicated region
      $region41: #{graph_triple_conv_net.1} parent=39 // pred_check
        %p801 = pneg %p106
      $region42: #{graph_triple_conv_net.1} parent=39 // pred_check_branch
        %803 = sbr.rel (%p801) target = $region44
      $region43: #{graph_triple_conv_net.1} parent=39 // pred_region
        %s804 = smul.u32 2, %s15
        %p805 = scmp.lt.s32.totalorder %s804, 3
        %s806 = scalar_select %p805, %s804, 3
        %s807 = smul.addr %s806, 8
        %s808 = scalar_lea.vmem %s3, %s807
      $region44: #{graph_triple_conv_net.1} parent=39 // pred_fallthru
        _
    $region40: #{graph_triple_conv_net.1} parent=5 // pred_fallthru
      _
  $region6: #{graph_triple_conv_net.1} parent=0 // loop_footer
    %s13 = sadd.s32 1, %s9
  $region7: #{graph_triple_conv_net.1} parent=0 // loop_footer_branch
    %8 = sbr.rel target = $region3
  $region8: #{graph_triple_conv_net.1} parent=0 // loop_exit
    _

</llo_original>
